<compile_context>
chip_gen: v6e
topology: v6e:2x2x1
jax: 0.10.0
libtpu: 0.0.40
codegen_flags: <defaults>
</compile_context>

<pallas_src>
import functools

import jax
import jax.numpy as jnp
from jax import lax
from jax.experimental import pallas as pl
from jax.experimental.pallas import tpu as pltpu

KSIZE = 3
NEG_SLOPE = 0.2
UPSCALE = 2


def _subpixel_conv_lrelu_kernel(x_ref, w_ref, b_ref, o_ref, *, tile_h, w_pad):
    """One (image, row-tile) step of fused upsample->conv3x3->LeakyReLU.

    x_ref : (C, (tile_h+2)*w_pad + 2) flat zero-padded row slab (lane-dense);
            rows of the padded image have stride w_pad = W + 2.
    w_ref : (4*C, 9*C) phase-folded weights; rows (a, b, c_out), cols (ty, tx, c_in).
    b_ref : (4*C, 1)   bias replicated per output phase.
    o_ref : (4*C, tile_h*w_pad)  columns are (t_local, j); the last 2 columns of
            each row are garbage and dropped by the wrapper.
    """
    q = tile_h * w_pad

    # One contiguous lane-dense load of the whole tile.
    x = x_ref[...]

    # im2col: each of the 9 taps is a STATIC uniform lane shift (ty*w_pad + tx)
    # of the flat padded slab.  Zero padding handles all borders, no masks.
    taps = []
    for ty in range(KSIZE):
        for tx in range(KSIZE):
            s = ty * w_pad + tx
            taps.append(x[:, s:s + q])
    patches = jnp.concatenate(taps, axis=0)                    # (9C, q)

    # Single MXU matmul computing all 4 output phases at once (K = 9*C).
    y = jnp.dot(w_ref[...], patches, preferred_element_type=jnp.float32)
    y = y + b_ref[...]                                         # (4C, 1) broadcast
    y = jnp.where(y >= 0, y, NEG_SLOPE * y)                    # LeakyReLU(0.2)
    o_ref[...] = y.astype(o_ref.dtype)


def _fold_subpixel_weights(weight_oihw):
    """Fold the 3x3 kernel into 4 phase kernels over the original grid.

    nearest-2x + 3x3 conv  ==  for each output phase (a, b) in {0,1}^2:
        y[c, 2i+a, 2j+b] = sum_{ty,tx,ci} Wf[a,b,c,ty,tx,ci] * x_pad[ci, i+ty, j+tx]
    where original taps (ky, kx) collapse onto (ty, tx):
        a==0: ky0->ty0, ky1->ty1, ky2->ty1   a==1: ky0->ty1, ky1->ty1, ky2->ty2
    (same for b / kx).  Pure adds/stacks -> exact in f32.
    """
    w = weight_oihw                                            # (Co, Ci, 3, 3)
    zeros = jnp.zeros_like(w[:, :, 0, :])
    ra0 = jnp.stack([w[:, :, 0, :], w[:, :, 1, :] + w[:, :, 2, :], zeros], axis=2)
    ra1 = jnp.stack([zeros, w[:, :, 0, :] + w[:, :, 1, :], w[:, :, 2, :]], axis=2)
    wa = jnp.stack([ra0, ra1], axis=0)                         # (2a, Co, Ci, ty, kx)
    zeros2 = jnp.zeros_like(wa[..., 0])
    cb0 = jnp.stack([wa[..., 0], wa[..., 1] + wa[..., 2], zeros2], axis=-1)
    cb1 = jnp.stack([zeros2, wa[..., 0] + wa[..., 1], wa[..., 2]], axis=-1)
    wab = jnp.stack([cb0, cb1], axis=1)                        # (2a, 2b, Co, Ci, ty, tx)
    co, ci = w.shape[0], w.shape[1]
    # rows (a, b, co), cols (ty, tx, ci) -- matches the kernel's patch row order.
    return jnp.transpose(wab, (0, 1, 2, 4, 5, 3)).reshape(4 * co, 9 * ci)


@functools.partial(jax.jit, static_argnames=("upscale_factor", "block_rows"))
def upscale_block_forward(x_nchw, weight_oihw, bias, upscale_factor=2, block_rows=8):
    """UpscaleBlock forward: nearest-2x -> Conv2d(C,C,3,pad=1) -> LeakyReLU(0.2)."""
    assert upscale_factor == UPSCALE, "kernel specialised for 2x nearest upsample"
    N, C, H, W = x_nchw.shape
    Wp = W + 2

    # Row-tile height: largest divisor of H that is <= block_rows.
    # TODO(synk): pad H to a multiple of block_rows for awkward (e.g. prime) heights.
    th = max(d for d in range(1, min(H, block_rows) + 1) if H % d == 0)
    R = H // th
    L = (th + 2) * Wp + 2   # +2 trailing zeros so every tap slice stays in-bounds

    # ---- parameters: sub-pixel weight folding (tiny, exact, done once) ----
    w_fold = _fold_subpixel_weights(weight_oihw)               # (4C, 9C)
    b_fold = jnp.tile(bias, 4).reshape(4 * C, 1)               # (4C, 1)

    # ---- input: 1-px zero pad + overlapping (2-row halo) row tiles, lane-flattened ----
    xp = jnp.pad(x_nchw, ((0, 0), (0, 0), (1, 1), (1, 1)))     # (N, C, H+2, Wp)
    if R == 1:
        tiles = xp[:, None]                                    # (N, 1, C, H+2, Wp)
    else:
        tiles = jnp.stack(
            [xp[:, :, r * th:r * th + th + 2, :] for r in range(R)], axis=1)
    x_tiles = jnp.pad(tiles.reshape(N, R, C, (th + 2) * Wp),
                      ((0, 0), (0, 0), (0, 0), (0, 2)))        # (N, R, C, L)

    kernel = functools.partial(_subpixel_conv_lrelu_kernel, tile_h=th, w_pad=Wp)
    out = pl.pallas_call(
        kernel,
        out_shape=jax.ShapeDtypeStruct((N, R, 4 * C, th * Wp), x_nchw.dtype),
        grid_spec=pltpu.PrefetchScalarGridSpec(
            num_scalar_prefetch=0,
            grid=(N, R),
            in_specs=[
                pl.BlockSpec((pl.Squeezed(), pl.Squeezed(), C, L),
                             lambda n, r: (n, r, 0, 0)),
                pl.BlockSpec((4 * C, 9 * C), lambda n, r: (0, 0)),
                pl.BlockSpec((4 * C, 1), lambda n, r: (0, 0)),
            ],
            out_specs=pl.BlockSpec((pl.Squeezed(), pl.Squeezed(), 4 * C, th * Wp),
                                   lambda n, r: (n, r, 0, 0)),
        ),
        compiler_params=pltpu.CompilerParams(
            dimension_semantics=("parallel", "parallel")),     # megacore splits (N, R)
    )(x_tiles, w_fold, b_fold)

    # ---- phase de-interleave: rows (a,b,c), cols (t, padded j) -> (N,C,2H,2W) ----
    # Pure layout plumbing kept in the wrapper so the kernel's store stays lane-dense.
    y = out.reshape(N, R, 2, 2, C, th, Wp)[..., :W]            # (N,R,a,b,C,th,W)
    y = jnp.transpose(y, (0, 4, 1, 5, 2, 6, 3)).reshape(N, C, 2 * H, 2 * W)
    # TODO(synk): fold the final (a, b) phase interleave into the kernel's stores
    # (lane-interleaved writes) to drop the extra HBM pass over the 4x output.
    return y


def _reference(x_nchw, weight_oihw, bias, upscale_factor=2):
    """Plain-JAX reference: nearest upsample -> conv 'SAME' -> LeakyReLU (NCHW)."""
    x_up = jnp.repeat(jnp.repeat(x_nchw, upscale_factor, axis=2),
                      upscale_factor, axis=3)
    y = lax.conv_general_dilated(
        x_up, weight_oihw, window_strides=(1, 1), padding="SAME",
        dimension_numbers=("NCHW", "OIHW", "NCHW"))
    y = y + bias.reshape(1, -1, 1, 1)
    return jnp.where(y >= 0, y, NEG_SLOPE * y)


if __name__ == "__main__":
    # Small shapes consistent with the module: channels=8, spatial 16x16 input
    # -> 32x32 output after the 2x nearest upsample.  block_rows=8 -> 2 row
    # tiles per image, so the multi-tile path is exercised.
    N, C, H, W = 2, 8, 16, 16
    key = jax.random.PRNGKey(0)
    k_x, k_w, k_b = jax.random.split(key, 3)

    x = jax.random.normal(k_x, (N, C, H, W), dtype=jnp.float32)

    # Deterministic synthetic Conv2d(C, C, 3) parameters in PyTorch OIHW layout.
    fan_in = C * KSIZE * KSIZE
    bound = 1.0 / (fan_in ** 0.5)
    weight_oihw = jax.random.uniform(k_w, (C, C, KSIZE, KSIZE),
                                     dtype=jnp.float32, minval=-bound, maxval=bound)
    bias = jax.random.uniform(k_b, (C,), dtype=jnp.float32,
                              minval=-bound, maxval=bound)

    out = jax.block_until_ready(upscale_block_forward(x, weight_oihw, bias))
    ref = jax.block_until_ready(_reference(x, weight_oihw, bias))

    assert out.shape == (N, C, UPSCALE * H, UPSCALE * W)
    assert jnp.allclose(out, ref, atol=5e-4, rtol=5e-4), (
        "max abs err = %g" % float(jnp.max(jnp.abs(out - ref))))

    print("KERNEL_OK")
</pallas_src>

<mosaic_0001>
module attributes {stable_mosaic.version = 11 : i64} {
  func.func @_subpixel_conv_lrelu_kernel(%arg0: i32, %arg1: i32, %arg2: memref<1x1x8x182xf32, #tpu.memory_space<vmem>>, %arg3: memref<32x72xf32, #tpu.memory_space<vmem>>, %arg4: memref<32x1xf32, #tpu.memory_space<vmem>>, %arg5: memref<1x1x32x144xf32, #tpu.memory_space<vmem>>) attributes {dimension_semantics = [#tpu.dimension_semantics<parallel>, #tpu.dimension_semantics<parallel>], iteration_bounds = array<i64: 2, 2>, scalar_prefetch = 0 : i64, scratch_operands = 0 : i64, tpu.core_type = #tpu.core_type<tc>, window_params = [{transform_indices = @transform_0, window_bounds = array<i64: 1, 1, 8, 182>}, {pipeline_mode = #tpu.pipeline_mode<synchronous>, transform_indices = @transform_1, window_bounds = array<i64: 32, 72>}, {pipeline_mode = #tpu.pipeline_mode<synchronous>, transform_indices = @transform_2, window_bounds = array<i64: 32, 1>}, {transform_indices = @transform_3, window_bounds = array<i64: 1, 1, 32, 144>}]} {
    %c0 = arith.constant 0 : index
    %c0_0 = arith.constant 0 : index
    %c0_1 = arith.constant 0 : index
    %c0_2 = arith.constant 0 : index
    %0 = vector.load %arg2[%c0, %c0_0, %c0_1, %c0_2] : memref<1x1x8x182xf32, #tpu.memory_space<vmem>>, vector<1x1x8x182xf32>
    %1 = vector.shape_cast %0 : vector<1x1x8x182xf32> to vector<8x182xf32>
    %2 = vector.extract_strided_slice %1 {offsets = [0, 0], sizes = [8, 144], strides = [1, 1]} : vector<8x182xf32> to vector<8x144xf32>
    %3 = vector.extract_strided_slice %1 {offsets = [0, 1], sizes = [8, 144], strides = [1, 1]} : vector<8x182xf32> to vector<8x144xf32>
    %4 = vector.extract_strided_slice %1 {offsets = [0, 2], sizes = [8, 144], strides = [1, 1]} : vector<8x182xf32> to vector<8x144xf32>
    %5 = vector.extract_strided_slice %1 {offsets = [0, 18], sizes = [8, 144], strides = [1, 1]} : vector<8x182xf32> to vector<8x144xf32>
    %6 = vector.extract_strided_slice %1 {offsets = [0, 19], sizes = [8, 144], strides = [1, 1]} : vector<8x182xf32> to vector<8x144xf32>
    %7 = vector.extract_strided_slice %1 {offsets = [0, 20], sizes = [8, 144], strides = [1, 1]} : vector<8x182xf32> to vector<8x144xf32>
    %8 = vector.extract_strided_slice %1 {offsets = [0, 36], sizes = [8, 144], strides = [1, 1]} : vector<8x182xf32> to vector<8x144xf32>
    %9 = vector.extract_strided_slice %1 {offsets = [0, 37], sizes = [8, 144], strides = [1, 1]} : vector<8x182xf32> to vector<8x144xf32>
    %10 = vector.extract_strided_slice %1 {offsets = [0, 38], sizes = [8, 144], strides = [1, 1]} : vector<8x182xf32> to vector<8x144xf32>
    %11 = tpu.concatenate %2, %3, %4, %5, %6, %7, %8, %9, %10 in 0 : vector<8x144xf32>, vector<8x144xf32>, vector<8x144xf32>, vector<8x144xf32>, vector<8x144xf32>, vector<8x144xf32>, vector<8x144xf32>, vector<8x144xf32>, vector<8x144xf32> -> vector<72x144xf32>
    %c0_3 = arith.constant 0 : index
    %c0_4 = arith.constant 0 : index
    %12 = vector.load %arg3[%c0_3, %c0_4] : memref<32x72xf32, #tpu.memory_space<vmem>>, vector<32x72xf32>
    %cst = arith.constant dense<0.000000e+00> : vector<32x144xf32>
    %13 = tpu.matmul %12, %11, %cst {dimension_numbers = #tpu.dot_dimension_numbers<[1], [0], [0], [1], [0, 0, 1, 1], [], []>} : vector<32x72xf32>, vector<72x144xf32>, vector<32x144xf32> -> vector<32x144xf32>
    %c0_5 = arith.constant 0 : index
    %c0_6 = arith.constant 0 : index
    %14 = vector.load %arg4[%c0_5, %c0_6] : memref<32x1xf32, #tpu.memory_space<vmem>>, vector<32x1xf32>
    %15 = vector.broadcast %14 : vector<32x1xf32> to vector<32x144xf32>
    %16 = arith.addf %13, %15 : vector<32x144xf32>
    %cst_7 = arith.constant 0.000000e+00 : f32
    %17 = vector.broadcast %cst_7 : f32 to vector<32x144xf32>
    %18 = arith.cmpf oge, %16, %17 : vector<32x144xf32>
    %cst_8 = arith.constant 2.000000e-01 : f32
    %19 = vector.broadcast %cst_8 : f32 to vector<32x144xf32>
    %20 = arith.mulf %19, %16 : vector<32x144xf32>
    %21 = arith.select %18, %16, %20 : vector<32x144xi1>, vector<32x144xf32>
    %c0_9 = arith.constant 0 : index
    %c0_10 = arith.constant 0 : index
    %c0_11 = arith.constant 0 : index
    %c0_12 = arith.constant 0 : index
    %22 = vector.load %arg5[%c0_9, %c0_10, %c0_11, %c0_12] : memref<1x1x32x144xf32, #tpu.memory_space<vmem>>, vector<1x1x32x144xf32>
    %23 = vector.shape_cast %22 : vector<1x1x32x144xf32> to vector<32x144xf32>
    %24 = vector.shape_cast %21 : vector<32x144xf32> to vector<1x1x32x144xf32>
    tpu.vector_store %arg5[%c0_9, %c0_10, %c0_11, %c0_12], %24 {strides = array<i32>} : memref<1x1x32x144xf32, #tpu.memory_space<vmem>>, vector<1x1x32x144xf32>,
    return
  }
  func.func @transform_0(%arg0: i32, %arg1: i32) -> (i32, i32, i32, i32) {
    %c0_i32 = arith.constant 0 : i32
    %c0_i32_0 = arith.constant 0 : i32
    %c0_i32_1 = arith.constant 0 : i32
    return %arg0, %arg1, %c0_i32, %c0_i32_0 : i32, i32, i32, i32
  }
  func.func @transform_1(%arg0: i32, %arg1: i32) -> (i32, i32) {
    %c0_i32 = arith.constant 0 : i32
    %c0_i32_0 = arith.constant 0 : i32
    %c0_i32_1 = arith.constant 0 : i32
    return %c0_i32, %c0_i32_0 : i32, i32
  }
  func.func @transform_2(%arg0: i32, %arg1: i32) -> (i32, i32) {
    %c0_i32 = arith.constant 0 : i32
    %c0_i32_0 = arith.constant 0 : i32
    %c0_i32_1 = arith.constant 0 : i32
    return %c0_i32, %c0_i32_0 : i32, i32
  }
  func.func @transform_3(%arg0: i32, %arg1: i32) -> (i32, i32, i32, i32) {
    %c0_i32 = arith.constant 0 : i32
    %c0_i32_0 = arith.constant 0 : i32
    %c0_i32_1 = arith.constant 0 : i32
    return %arg0, %arg1, %c0_i32, %c0_i32_0 : i32, i32, i32, i32
  }
}

</mosaic_0001>

<llo_original>
// kernel: tile.8
$region0: #{tile.8}
  #allocation0 [shape = 's32[1]{0}', space=sflag, size = 0x4, scoped, tag = 'scoped memory for tile.8']
  %s0 = inlined_call_operand.vmem [shape: f32[8], index: 0, kind: input, shape index: {}]
  %s1 = inlined_call_operand.vmem [shape: f32[4,8], index: 1, kind: output, shape index: {}]
  // Predicated region
  $region2: #{tile.8} parent=0 // pred_check
    _
  $region3: #{tile.8} parent=0 // pred_check_branch
    %3 = sbr.rel (0) target = $region5
  $region4: #{tile.8} parent=0 // pred_region
    _
  $region5: #{tile.8} parent=0 // pred_fallthru
    _
  %v4 = vld [vmem:[%s0] ss:$0 sm:$0xff]
  %5 = vst [vmem:[%s1] sm:$0xf] %v4

// kernel: tile.0
$region0: #{tile.0}
  %s0 = inlined_call_operand.vmem [shape: f32[4,8], index: 0, kind: input, shape index: {}]
  %s1 = inlined_call_operand.vmem [shape: f32[32,1], index: 1, kind: output, shape index: {}]
  $region1: #{tile.0} parent=0
    #allocation0 [shape = 'u8[4096]{0}', space=vmem, size = 0x1000, scoped, tag = 'scoped mem for input reshape']
    %s3 = sshll.u32 1, 4
    %s4 = ssub.s32 %s3, 1
    %v5 = vld [vmem:[%s0] sm:%s4]
    %6 = vst [vmem:[#allocation0] sm:%s4] %v5
    %v7 = vld [vmem:[#allocation0] sm:$0xf]
    %vm8 = vcmask 7168
    %9 = vst.msk [vmem:[%s1] ss:$8 sm:$0xf] %vm8, %v7
    %v10 = vld [vmem:[#allocation0] sm:$0xf]
    %11 = vrot.lane.b32.xlu0 %v10, 127
    %v12 = vpop.permute.xlu0 %11
    %vm13 = vcmask 7168
    %s14 = scalar_lea.vmem %s1, 1
    %15 = vst.msk [vmem:[%s14] ss:$8 sm:$0xf] %vm13, %v12
    %v16 = vld [vmem:[#allocation0] sm:$0xf]
    %17 = vrot.lane.b32.xlu0 %v16, 126
    %v18 = vpop.permute.xlu0 %17
    %vm19 = vcmask 7168
    %s20 = scalar_lea.vmem %s1, 2
    %21 = vst.msk [vmem:[%s20] ss:$8 sm:$0xf] %vm19, %v18
    %v22 = vld [vmem:[#allocation0] sm:$0xf]
    %23 = vrot.lane.b32.xlu0 %v22, 125
    %v24 = vpop.permute.xlu0 %23
    %vm25 = vcmask 7168
    %s26 = scalar_lea.vmem %s1, 3
    %27 = vst.msk [vmem:[%s26] ss:$8 sm:$0xf] %vm25, %v24
    %v28 = vld [vmem:[#allocation0] sm:$0xf]
    %29 = vrot.lane.b32.xlu0 %v28, 124
    %v30 = vpop.permute.xlu0 %29
    %vm31 = vcmask 7168
    %s32 = scalar_lea.vmem %s1, 4
    %33 = vst.msk [vmem:[%s32] ss:$8 sm:$0xf] %vm31, %v30
    %v34 = vld [vmem:[#allocation0] sm:$0xf]
    %35 = vrot.lane.b32.xlu0 %v34, 123
    %v36 = vpop.permute.xlu0 %35
    %vm37 = vcmask 7168
    %s38 = scalar_lea.vmem %s1, 5
    %39 = vst.msk [vmem:[%s38] ss:$8 sm:$0xf] %vm37, %v36
    %v40 = vld [vmem:[#allocation0] sm:$0xf]
    %41 = vrot.lane.b32.xlu0 %v40, 122
    %v42 = vpop.permute.xlu0 %41
    %vm43 = vcmask 7168
    %s44 = scalar_lea.vmem %s1, 6
    %45 = vst.msk [vmem:[%s44] ss:$8 sm:$0xf] %vm43, %v42
    %v46 = vld [vmem:[#allocation0] sm:$0xf]
    %47 = vrot.lane.b32.xlu0 %v46, 121
    %v48 = vpop.permute.xlu0 %47
    %vm49 = vcmask 7168
    %s50 = scalar_lea.vmem %s1, 7
    %51 = vst.msk [vmem:[%s50] ss:$8 sm:$0xf] %vm49, %v48

// kernel: upscale_block_forward.1
$region0: #{upscale_block_forward.1}
  #allocation0 [shape = 'u32[]', space=smem, size = 0x4, offset = 0x4, fixed_abs, tag = 'smem constant byte address 0x4 - core index']
  #allocation1 [shape = 'u32[144,128]{1,0:T(1,128)}', space=vmem, size = 0x12000, scoped, tag = 'internal scratch']
  %s0 = inlined_call_operand.vmem [shape: f32[2,2,8,182], index: 0, kind: input, shape index: {}]
  %s1 = inlined_call_operand.vmem [shape: f32[32,72], index: 1, kind: input, shape index: {}]
  %s2 = inlined_call_operand.vmem [shape: f32[32,1], index: 2, kind: input, shape index: {}]
  %s3 = inlined_call_operand.vmem [shape: f32[2,2,32,144], index: 3, kind: output, shape index: {}]
  %s4 = sld [smem:[#allocation0]]
  $region45: #{upscale_block_forward.1} parent=0
    _
  %s6 = ssub.s32 1, %s4
  %s7 = scalar_select 0, %s6, %s4
  loop: start=0, step=1, limit=6
  $region2: #{upscale_block_forward.1} parent=0 // loop_pre_header
    _
  $region3: #{upscale_block_forward.1} parent=0 // loop_header
    %s9 = sphi 0, %s13
    %p10 = scmp.ge.s32.totalorder %s9, 6
    %s16 = sphi 0, %s28
    %s17 = sphi 0, %s24
    %s18 = sphi 0, %s16
    %s19 = sphi 0, %s17
    %s20 = sphi 0, %s18
    %s21 = sphi 0, %s19
    %s33 = sphi 0, %s35
    %s36 = sphi 0, %s33
    %s37 = sphi 0, %s36
    %s53 = sphi 0, %s37
    %s57 = sphi 0, %s57
    %s59 = sphi 0, %s57
    %s60 = sphi 0, %s59
    %s74 = sphi 0, %s60
    %s78 = sphi 0, %s78
    %s80 = sphi 0, %s78
    %s81 = sphi 0, %s80
    %s95 = sphi 0, %s81
    %s103 = sphi 0, %s105
    %s106 = sphi 0, %s103
    %s107 = sphi 0, %s106
    %s123 = sphi 0, %s107
  $region4: #{upscale_block_forward.1} parent=0 // loop_header_branch
    %12 = sbr.rel (%p10) target = $region8
  $region5: #{upscale_block_forward.1} parent=0 // loop_body
    %s14 = ssub.s32 %s9, 1
    %s15 = ssub.s32 %s9, 2
    %s22 = sadd.s32 1, %s17
    %p23 = scmp.ge.s32.totalorder %s22, 2
    %s24 = scalar_select %p23, 0, %s22
    %s25 = sadd.s32 1, %s16
    %s26 = scalar_select %p23, %s25, %s16
    %p27 = scmp.ge.s32.totalorder %s26, 2
    %s28 = scalar_select %p27, 0, %s26
    %s29 = ssub.s32 %s16, %s28
    %s30 = ssub.s32 %s17, %s24
    %s31 = sor.u32 %s29, %s30
    %p32 = scmp.eq.s32.totalorder %s31, 0
    %s34 = sadd.s32 %s33, 1
    %s35 = scalar_select %p32, %s33, %s34
    %p38 = pneg %p32
    %p39 = scmp.eq.s32.totalorder %s9, 3
    %p40 = por %p38, %p39
    %p41 = scmp.ne.s32.totalorder %s33, %s36
    %p42 = scmp.eq.s32.totalorder %s9, 0
    %p43 = por %p41, %p42
    %p44 = scmp.ne.s32.totalorder %s33, %s36
    %p45 = scmp.eq.s32.totalorder %s14, 3
    %p46 = por %p44, %p45
    %p47 = scmp.ne.s32.totalorder %s36, %s37
    %p48 = scmp.eq.s32.totalorder %s14, 0
    %p49 = por %p47, %p48
    %p50 = scmp.ne.s32.totalorder %s36, %s37
    %p51 = scmp.eq.s32.totalorder %s15, 3
    %p52 = por %p50, %p51
    %p54 = scmp.ne.s32.totalorder %s37, %s53
    %p55 = scmp.eq.s32.totalorder %s15, 0
    %p56 = por %p54, %p55
    %s58 = sadd.s32 %s57, 1
    %p61 = scmp.eq.s32.totalorder %s9, 3
    %p62 = scmp.ne.s32.totalorder %s57, %s59
    %p63 = scmp.eq.s32.totalorder %s9, 0
    %p64 = por %p62, %p63
    %p65 = scmp.ne.s32.totalorder %s57, %s59
    %p66 = scmp.eq.s32.totalorder %s14, 3
    %p67 = por %p65, %p66
    %p68 = scmp.ne.s32.totalorder %s59, %s60
    %p69 = scmp.eq.s32.totalorder %s14, 0
    %p70 = por %p68, %p69
    %p71 = scmp.ne.s32.totalorder %s59, %s60
    %p72 = scmp.eq.s32.totalorder %s15, 3
    %p73 = por %p71, %p72
    %p75 = scmp.ne.s32.totalorder %s60, %s74
    %p76 = scmp.eq.s32.totalorder %s15, 0
    %p77 = por %p75, %p76
    %s79 = sadd.s32 %s78, 1
    %p82 = scmp.eq.s32.totalorder %s9, 3
    %p83 = scmp.ne.s32.totalorder %s78, %s80
    %p84 = scmp.eq.s32.totalorder %s9, 0
    %p85 = por %p83, %p84
    %p86 = scmp.ne.s32.totalorder %s78, %s80
    %p87 = scmp.eq.s32.totalorder %s14, 3
    %p88 = por %p86, %p87
    %p89 = scmp.ne.s32.totalorder %s80, %s81
    %p90 = scmp.eq.s32.totalorder %s14, 0
    %p91 = por %p89, %p90
    %p92 = scmp.ne.s32.totalorder %s80, %s81
    %p93 = scmp.eq.s32.totalorder %s15, 3
    %p94 = por %p92, %p93
    %p96 = scmp.ne.s32.totalorder %s81, %s95
    %p97 = scmp.eq.s32.totalorder %s15, 0
    %p98 = por %p96, %p97
    %s99 = ssub.s32 %s16, %s28
    %s100 = ssub.s32 %s17, %s24
    %s101 = sor.u32 %s99, %s100
    %p102 = scmp.eq.s32.totalorder %s101, 0
    %s104 = sadd.s32 %s103, 1
    %s105 = scalar_select %p102, %s103, %s104
    %p108 = pneg %p102
    %p109 = scmp.eq.s32.totalorder %s9, 3
    %p110 = por %p108, %p109
    %p111 = scmp.ne.s32.totalorder %s103, %s106
    %p112 = scmp.eq.s32.totalorder %s9, 0
    %p113 = por %p111, %p112
    %p114 = scmp.ne.s32.totalorder %s103, %s106
    %p115 = scmp.eq.s32.totalorder %s14, 3
    %p116 = por %p114, %p115
    %p117 = scmp.ne.s32.totalorder %s106, %s107
    %p118 = scmp.eq.s32.totalorder %s14, 0
    %p119 = por %p117, %p118
    %p120 = scmp.ne.s32.totalorder %s106, %s107
    %p121 = scmp.eq.s32.totalorder %s15, 3
    %p122 = por %p120, %p121
    %p124 = scmp.ne.s32.totalorder %s107, %s123
    %p125 = scmp.eq.s32.totalorder %s15, 0
    %p126 = por %p124, %p125
    %p127 = scmp.le.s32.totalorder 1, %s9
    %p128 = scmp.lt.s32.totalorder %s9, 5
    %p129 = pnand %p127, %p128
    %p130 = pneg %p129
    // Predicated region
    $region9: #{upscale_block_forward.1} parent=5 // pred_check
      _
    $region10: #{upscale_block_forward.1} parent=5 // pred_check_branch
      %132 = sbr.rel (%p129) target = $region12
    $region11: #{upscale_block_forward.1} parent=5 // pred_region
      %s133 = ssub.s32 %s9, 1
      // Predicated region
      $region13: #{upscale_block_forward.1} parent=11 // pred_check
        %p134 = pneg %p70
      $region14: #{upscale_block_forward.1} parent=11 // pred_check_branch
        %136 = sbr.rel (%p134) target = $region16
      $region15: #{upscale_block_forward.1} parent=11 // pred_region
        _
      $region16: #{upscale_block_forward.1} parent=11 // pred_fallthru
        _
      // Predicated region
      $region17: #{upscale_block_forward.1} parent=11 // pred_check
        %p137 = pneg %p91
      $region18: #{upscale_block_forward.1} parent=11 // pred_check_branch
        %139 = sbr.rel (%p137) target = $region20
      $region19: #{upscale_block_forward.1} parent=11 // pred_region
        _
      $region20: #{upscale_block_forward.1} parent=11 // pred_fallthru
        _
    $region12: #{upscale_block_forward.1} parent=5 // pred_fallthru
      _
    %p140 = scmp.lt.s32.totalorder %s9, 4
    // Predicated region
    $region21: #{upscale_block_forward.1} parent=5 // pred_check
      %p141 = pneg %p140
    $region22: #{upscale_block_forward.1} parent=5 // pred_check_branch
      %143 = sbr.rel (%p141) target = $region24
    $region23: #{upscale_block_forward.1} parent=5 // pred_region
      // Predicated region
      $region25: #{upscale_block_forward.1} parent=23 // pred_check
        %p144 = pneg %p43
      $region26: #{upscale_block_forward.1} parent=23 // pred_check_branch
        %146 = sbr.rel (%p144) target = $region28
      $region27: #{upscale_block_forward.1} parent=23 // pred_region
        %p147 = scmp.lt.s32.totalorder %s16, 1
        %s148 = scalar_select %p147, %s16, 1
        %p149 = scmp.lt.s32.totalorder %s17, 1
        %s150 = scalar_select %p149, %s17, 1
        %s151 = smul.addr %s150, 2
        %s152 = smul.addr %s148, 4
        %s153 = sadd.s32 %s151, %s152
        %s154 = smul.addr %s153, 8
        %s155 = scalar_lea.vmem %s0, %s154
      $region28: #{upscale_block_forward.1} parent=23 // pred_fallthru
        _
    $region24: #{upscale_block_forward.1} parent=5 // pred_fallthru
      _
    %p156 = scmp.le.s32.totalorder 1, %s9
    %p157 = scmp.lt.s32.totalorder %s9, 5
    %p158 = pnand %p156, %p157
    %p159 = pneg %p158
    // Predicated region
    $region29: #{upscale_block_forward.1} parent=5 // pred_check
      _
    $region30: #{upscale_block_forward.1} parent=5 // pred_check_branch
      %161 = sbr.rel (%p158) target = $region32
    $region31: #{upscale_block_forward.1} parent=5 // pred_region
      %s162 = ssub.s32 %s9, 1
      %p163 = scmp.lt.s32.totalorder %s18, 1
      %s164 = scalar_select %p163, %s18, 1
      %p165 = scmp.lt.s32.totalorder %s19, 1
      %s166 = scalar_select %p165, %s19, 1
      %s167 = smul.addr %s166, 2
      %s168 = smul.addr %s164, 4
      %s169 = sadd.s32 %s167, %s168
      %s170 = smul.addr %s169, 8
      %s171 = scalar_lea.vmem %s0, %s170
      %p172 = pneg %p49
      %p173 = pneg %p46
      %p174 = pneg %p70
      %p175 = pneg %p67
      %p176 = pneg %p91
      %p177 = pneg %p88
      %p178 = pneg %p119
      %p179 = pneg %p116
      %p180 = scmp.lt.s32.totalorder %s18, 1
      %s181 = scalar_select %p180, %s18, 1
      %p182 = scmp.lt.s32.totalorder %s19, 1
      %s183 = scalar_select %p182, %s19, 1
      %s184 = smul.addr %s183, 8
      %s185 = smul.addr %s181, 16
      %s186 = sadd.s32 %s184, %s185
      %s187 = smul.addr %s186, 8
      %s188 = scalar_lea.vmem %s3, %s187
      %p189 = scmp.lt.s32.totalorder %s18, 1
      %s190 = scalar_select %p189, %s18, 1
      %p191 = scmp.lt.s32.totalorder %s19, 1
      %s192 = scalar_select %p191, %s19, 1
      %s193 = smul.addr %s192, 2
      %s194 = smul.addr %s190, 4
      %s195 = sadd.s32 %s193, %s194
      %s196 = smul.addr %s195, 8
      %s197 = scalar_lea.vmem %s0, %s196
      %p198 = scmp.lt.s32.totalorder %s18, 1
      %s199 = scalar_select %p198, %s18, 1
      %p200 = scmp.lt.s32.totalorder %s19, 1
      %s201 = scalar_select %p200, %s19, 1
      %s202 = smul.addr %s201, 8
      %s203 = smul.addr %s199, 16
      %s204 = sadd.s32 %s202, %s203
      %s205 = smul.addr %s204, 8
      %s206 = scalar_lea.vmem %s3, %s205
      %v207 = vld [vmem:[%s197] sm:$0xff]
      %v208 = vld [vmem:[%s197 + $0x8] sm:$0xff]
      %211 = vrot.lane.b32.xlu0 %v207, 127
      %v212 = vpop.permute.xlu0 %211
      %213 = vrot.lane.b32.xlu0 %v208, 127
      %v214 = vpop.permute.xlu0 %213
      %vm215 = vcmask 1039360
      %v216 = vsel %vm215, %v212, %v214
      %219 = vrot.lane.b32.xlu0 %v207, 126
      %v220 = vpop.permute.xlu0 %219
      %221 = vrot.lane.b32.xlu0 %v208, 126
      %v222 = vpop.permute.xlu0 %221
      %vm223 = vcmask 1031168
      %v224 = vsel %vm223, %v220, %v222
      %227 = vrot.lane.b32.xlu0 %v207, 110
      %v228 = vpop.permute.xlu0 %227
      %229 = vrot.lane.b32.xlu0 %v208, 110
      %v230 = vpop.permute.xlu0 %229
      %vm231 = vcmask 900096
      %v232 = vsel %vm231, %v228, %v230
      %235 = vrot.lane.b32.xlu0 %v207, 109
      %v236 = vpop.permute.xlu0 %235
      %237 = vrot.lane.b32.xlu0 %v208, 109
      %v238 = vpop.permute.xlu0 %237
      %vm239 = vcmask 891904
      %v240 = vsel %vm239, %v236, %v238
      %243 = vrot.lane.b32.xlu0 %v207, 108
      %v244 = vpop.permute.xlu0 %243
      %245 = vrot.lane.b32.xlu0 %v208, 108
      %v246 = vpop.permute.xlu0 %245
      %vm247 = vcmask 883712
      %v248 = vsel %vm247, %v244, %v246
      %251 = vrot.lane.b32.xlu0 %v207, 92
      %v252 = vpop.permute.xlu0 %251
      %253 = vrot.lane.b32.xlu0 %v208, 92
      %v254 = vpop.permute.xlu0 %253
      %vm255 = vcmask 752640
      %v256 = vsel %vm255, %v252, %v254
      %259 = vrot.lane.b32.xlu0 %v207, 91
      %v260 = vpop.permute.xlu0 %259
      %261 = vrot.lane.b32.xlu0 %v208, 91
      %v262 = vpop.permute.xlu0 %261
      %vm263 = vcmask 744448
      %v264 = vsel %vm263, %v260, %v262
      %267 = vrot.lane.b32.xlu0 %v207, 90
      %v268 = vpop.permute.xlu0 %267
      %269 = vrot.lane.b32.xlu0 %v208, 90
      %v270 = vpop.permute.xlu0 %269
      %vm271 = vcmask 736256
      %v272 = vsel %vm271, %v268, %v270
      %v275 = vld [vmem:[%s1] sm:$0xff]
      %v276 = vld [vmem:[%s1 + $0x8] sm:$0xff]
      %v277 = vld [vmem:[%s1 + $0x10] sm:$0xff]
      %v278 = vld [vmem:[%s1 + $0x18] sm:$0xff]
      %v279 = vld [vmem:[%s2] sm:$0xff]
      %v280 = vld [vmem:[%s2 + $0x8] sm:$0xff]
      %v281 = vld [vmem:[%s2 + $0x10] sm:$0xff]
      %v282 = vld [vmem:[%s2 + $0x18] sm:$0xff]
      %284 = vset.pattern.permute.xlu0 0
      %285 = vperm.xlu0 %284, %v279
      %v286 = vpop.permute.xlu0 %285
      %289 = vset.pattern.permute.xlu0 0
      %290 = vperm.xlu0 %289, %v280
      %v291 = vpop.permute.xlu0 %290
      %294 = vset.pattern.permute.xlu0 0
      %295 = vperm.xlu0 %294, %v281
      %v296 = vpop.permute.xlu0 %295
      %299 = vset.pattern.permute.xlu0 0
      %300 = vperm.xlu0 %299, %v282
      %v301 = vpop.permute.xlu0 %300
      %vm303 = vcmask 588800
      %v305 = vsel %vm303, %v275, 0
      %v308 = vsel %vm303, %v276, 0
      %v311 = vsel %vm303, %v277, 0
      %v314 = vsel %vm303, %v278, 0
      %316 = vmatprep.subr.mxu0 0.0
      %317 = vmatpush1.msra.mxu0 0.0
      %318 = vmatprep.subr.mxu0 0.0
      %319 = vmatpush1.msra.mxu0 0.0
      %320 = vmatprep.subr.mxu0 0.0
      %321 = vmatpush1.msra.mxu0 0.0
      %322 = vmatprep.subr.mxu0 0.0
      %323 = vmatpush1.msra.mxu0 0.0
      %324 = vmatprep.subr.mxu0 0.0
      %325 = vmatpush1.msra.mxu0 0.0
      %326 = vmatprep.subr.mxu0 0.0
      %327 = vmatpush1.msra.mxu0 0.0
      %328 = vmatprep.subr.mxu0 0.0
      %329 = vmatpush1.msra.mxu0 0.0
      %330 = vmatprep.subr.mxu0 %v270
      %331 = vmatpush1.msra.mxu0 %v272
      %332 = vmatprep.subr.mxu0 %v262
      %333 = vmatpush1.msra.mxu0 %v264
      %334 = vmatprep.subr.mxu0 %v254
      %335 = vmatpush1.msra.mxu0 %v256
      %336 = vmatprep.subr.mxu0 %v246
      %337 = vmatpush1.msra.mxu0 %v248
      %338 = vmatprep.subr.mxu0 %v238
      %339 = vmatpush1.msra.mxu0 %v240
      %340 = vmatprep.subr.mxu0 %v230
      %341 = vmatpush1.msra.mxu0 %v232
      %342 = vmatprep.subr.mxu0 %v222
      %343 = vmatpush1.msra.mxu0 %v224
      %344 = vmatprep.subr.mxu0 %v214
      %345 = vmatpush1.msra.mxu0 %v216
      %346 = vmatprep.subr.mxu0 %v208
      %347 = vmatpush1.msra.mxu0 %v207
      %348 = vmatprep.subr.mxu0 0.0
      %349 = vmatpush2.msra.mxu0 0.0
      %350 = vmatprep.subr.mxu0 0.0
      %351 = vmatpush2.msra.mxu0 0.0
      %352 = vmatprep.subr.mxu0 0.0
      %353 = vmatpush2.msra.mxu0 0.0
      %354 = vmatprep.subr.mxu0 0.0
      %355 = vmatpush2.msra.mxu0 0.0
      %356 = vmatprep.subr.mxu0 0.0
      %357 = vmatpush2.msra.mxu0 0.0
      %358 = vmatprep.subr.mxu0 0.0
      %359 = vmatpush2.msra.mxu0 0.0
      %360 = vmatprep.subr.mxu0 0.0
      %361 = vmatpush2.msra.mxu0 0.0
      %362 = vmatprep.subr.mxu0 0.0
      %363 = vmatpush2.msra.mxu0 0.0
      %364 = vmatprep.subr.mxu0 0.0
      %365 = vmatpush2.msra.mxu0 0.0
      %366 = vmatprep.subr.mxu0 0.0
      %367 = vmatpush2.msra.mxu0 0.0
      %368 = vmatprep.subr.mxu0 0.0
      %369 = vmatpush2.msra.mxu0 0.0
      %370 = vmatprep.subr.mxu0 0.0
      %371 = vmatpush2.msra.mxu0 0.0
      %372 = vmatprep.subr.mxu0 0.0
      %373 = vmatpush2.msra.mxu0 0.0
      %374 = vmatprep.subr.mxu0 0.0
      %375 = vmatpush2.msra.mxu0 0.0
      %376 = vmatprep.subr.mxu0 0.0
      %377 = vmatpush2.msra.mxu0 0.0
      %378 = vmatprep.subr.mxu0 0.0
      %379 = vmatpush2.msra.mxu0 0.0
      %380 = vmatprep.mubr.f32.mxu0 0.0
      %381 = vmatmul.mubr.f32.gmra.mxu0 %v305
      %v382 = vpop.f32.mrf.mxu0
      %v383 = vadd.f32 %v286, %v382
      %v384 = vpop.f32.mrf.mxu0
      %v385 = vadd.f32 %v286, %v384
      %386 = vmatprep.mubr.f32.mxu0 0.0
      %387 = vmatmul.mubr.f32.gmra.mxu0 %v308
      %v388 = vpop.f32.mrf.mxu0
      %v389 = vadd.f32 %v291, %v388
      %v390 = vpop.f32.mrf.mxu0
      %v391 = vadd.f32 %v291, %v390
      %392 = vmatprep.mubr.f32.mxu0 0.0
      %393 = vmatmul.mubr.f32.gmra.mxu0 %v311
      %v394 = vpop.f32.mrf.mxu0
      %v395 = vadd.f32 %v296, %v394
      %v396 = vpop.f32.mrf.mxu0
      %v397 = vadd.f32 %v296, %v396
      %398 = vmatprep.mubr.f32.mxu0 0.0
      %399 = vmatmul.mubr.f32.gmra.mxu0 %v314
      %v400 = vpop.f32.mrf.mxu0
      %v401 = vadd.f32 %v301, %v400
      %v402 = vpop.f32.mrf.mxu0
      %v403 = vadd.f32 %v301, %v402
      %404 = vdwg.mxu0
      %vm405 = vcmp.ge.f32.partialorder %v383, 0.0
      %vm406 = vcmp.ge.f32.partialorder %v385, 0.0
      %vm407 = vcmp.ge.f32.partialorder %v389, 0.0
      %vm408 = vcmp.ge.f32.partialorder %v391, 0.0
      %vm409 = vcmp.ge.f32.partialorder %v395, 0.0
      %vm410 = vcmp.ge.f32.partialorder %v397, 0.0
      %vm411 = vcmp.ge.f32.partialorder %v401, 0.0
      %vm412 = vcmp.ge.f32.partialorder %v403, 0.0
      %v413 = vmul.f32 %v383, 0.2
      %v414 = vmul.f32 %v385, 0.2
      %v415 = vmul.f32 %v389, 0.2
      %v416 = vmul.f32 %v391, 0.2
      %v417 = vmul.f32 %v395, 0.2
      %v418 = vmul.f32 %v397, 0.2
      %v419 = vmul.f32 %v401, 0.2
      %v420 = vmul.f32 %v403, 0.2
      %v421 = vsel %vm405, %v383, %v413
      %v422 = vsel %vm406, %v385, %v414
      %v423 = vsel %vm407, %v389, %v415
      %v424 = vsel %vm408, %v391, %v416
      %v425 = vsel %vm409, %v395, %v417
      %v426 = vsel %vm410, %v397, %v418
      %v427 = vsel %vm411, %v401, %v419
      %v428 = vsel %vm412, %v403, %v420
      %429 = vst [vmem:[%s206] sm:$0xff] %v421
      %vm430 = vcmask 130048
      %431 = vst.msk [vmem:[%s206 + $0x8] sm:$0xff] %vm430, %v422
      %432 = vst [vmem:[%s206 + $0x10] sm:$0xff] %v423
      %433 = vst.msk [vmem:[%s206 + $0x18] sm:$0xff] %vm430, %v424
      %434 = vst [vmem:[%s206 + $0x20] sm:$0xff] %v425
      %435 = vst.msk [vmem:[%s206 + $0x28] sm:$0xff] %vm430, %v426
      %436 = vst [vmem:[%s206 + $0x30] sm:$0xff] %v427
      %437 = vst.msk [vmem:[%s206 + $0x38] sm:$0xff] %vm430, %v428
      %p438 = scmp.lt.s32.totalorder %s18, 1
      %s439 = scalar_select %p438, %s18, 1
      %p440 = scmp.lt.s32.totalorder %s19, 1
      %s441 = scalar_select %p440, %s19, 1
      %s442 = smul.addr %s441, 8
      %s443 = smul.addr %s439, 16
      %s444 = sadd.s32 %s442, %s443
      %s445 = smul.addr %s444, 8
      %s446 = scalar_lea.vmem %s3, %s445
      // Predicated region
      $region33: #{upscale_block_forward.1} parent=31 // pred_check
        %p447 = pneg %p116
      $region34: #{upscale_block_forward.1} parent=31 // pred_check_branch
        %449 = sbr.rel (%p447) target = $region36
      $region35: #{upscale_block_forward.1} parent=31 // pred_region
        _
      $region36: #{upscale_block_forward.1} parent=31 // pred_fallthru
        _
    $region32: #{upscale_block_forward.1} parent=5 // pred_fallthru
      _
    %p450 = scmp.le.s32.totalorder 2, %s9
    // Predicated region
    $region37: #{upscale_block_forward.1} parent=5 // pred_check
      %p451 = pneg %p450
    $region38: #{upscale_block_forward.1} parent=5 // pred_check_branch
      %453 = sbr.rel (%p451) target = $region40
    $region39: #{upscale_block_forward.1} parent=5 // pred_region
      %s454 = ssub.s32 %s9, 2
      // Predicated region
      $region41: #{upscale_block_forward.1} parent=39 // pred_check
        %p455 = pneg %p122
      $region42: #{upscale_block_forward.1} parent=39 // pred_check_branch
        %457 = sbr.rel (%p455) target = $region44
      $region43: #{upscale_block_forward.1} parent=39 // pred_region
        %p458 = scmp.lt.s32.totalorder %s20, 1
        %s459 = scalar_select %p458, %s20, 1
        %p460 = scmp.lt.s32.totalorder %s21, 1
        %s461 = scalar_select %p460, %s21, 1
        %s462 = smul.addr %s461, 8
        %s463 = smul.addr %s459, 16
        %s464 = sadd.s32 %s462, %s463
        %s465 = smul.addr %s464, 8
        %s466 = scalar_lea.vmem %s3, %s465
      $region44: #{upscale_block_forward.1} parent=39 // pred_fallthru
        _
    $region40: #{upscale_block_forward.1} parent=5 // pred_fallthru
      _
  $region6: #{upscale_block_forward.1} parent=0 // loop_footer
    %s13 = sadd.s32 1, %s9
  $region7: #{upscale_block_forward.1} parent=0 // loop_footer_branch
    %8 = sbr.rel target = $region3
  $region8: #{upscale_block_forward.1} parent=0 // loop_exit
    _

</llo_original>
